<compile_context>
chip_gen: v7x
topology: tpu7x:2x2x1
jax: 0.10.0
libtpu: 0.0.40
codegen_flags: <defaults>
</compile_context>

<pallas_src>
import jax
import jax.numpy as jnp
from jax.experimental import pallas as pl
from jax.experimental.pallas import tpu as pltpu

_LANES = 128
_SUBLANES = 8


def _logistic_kernel(x_ref, w_ref, b_ref, o_ref):
    # x_ref: (tile_rows, 128) VMEM tile; w_ref / b_ref: (1,) f32 SMEM scalars.
    w = w_ref[0]
    b = b_ref[0]
    z = x_ref[...].astype(jnp.float32) * w + b            # VPU fma, no MXU
    # sigmoid(z) == 0.5 * (1 + tanh(z / 2)) -> one EUP push per vreg.
    o_ref[...] = (0.5 * (jnp.tanh(0.5 * z) + 1.0)).astype(o_ref.dtype)


def _default_tile_rows():
    try:
        kind = jax.devices()[0].device_kind.lower()
    except Exception:
        kind = ""
    # v7x: faster HBM -> amortize the ~0.35us/step overhead with bigger tiles.
    return 4096 if "v7" in kind else 2048


def logistic_regression_forward(x, weight, bias, *, tile_rows=None,
                                fallback_elems=8192):
    """x: (..., 1), weight: (1, 1), bias: (1,) -> sigmoid(x * w + b), same shape."""
    dtype = x.dtype
    w_s = weight.reshape(-1).astype(jnp.float32)           # (1,) f32 in SMEM
    b_s = bias.reshape(-1).astype(jnp.float32)             # (1,) f32 in SMEM

    total = x.size
    # Tiny batch: kernel launch + per-step overhead dwarf the work; let XLA fuse it.
    if total < fallback_elems:
        z = x.astype(jnp.float32) * w_s[0] + b_s[0]
        return jax.nn.sigmoid(z).astype(dtype)

    if tile_rows is None:
        tile_rows = _default_tile_rows()

    xf = x.reshape(-1)                                      # free reshape
    aligned = (total % _LANES) == 0
    if not aligned:
        # Ragged slow path: one pad copy + one slice copy.  Aligned sizes
        # (the common case) never touch this branch.
        padded_total = pl.cdiv(total, _LANES) * _LANES
        xf = jnp.pad(xf, (0, padded_total - total))
    rows = xf.shape[0] // _LANES
    x2 = xf.reshape(rows, _LANES)                           # free reshape, lane-dense

    # tile_rows: multiple of 8 sublanes, no bigger than needed for this input.
    tile_rows = max(_SUBLANES, (tile_rows // _SUBLANES) * _SUBLANES)
    tile_rows = min(tile_rows, pl.cdiv(rows, _SUBLANES) * _SUBLANES)

    grid = (pl.cdiv(rows, tile_rows),)                      # partial last block is masked
    out2 = pl.pallas_call(
        _logistic_kernel,
        out_shape=jax.ShapeDtypeStruct((rows, _LANES), dtype),
        grid_spec=pl.GridSpec(
            grid=grid,
            in_specs=[
                pl.BlockSpec((tile_rows, _LANES), lambda i: (i, 0)),
                pl.BlockSpec(memory_space=pltpu.MemorySpace.SMEM),
                pl.BlockSpec(memory_space=pltpu.MemorySpace.SMEM),
            ],
            out_specs=pl.BlockSpec((tile_rows, _LANES), lambda i: (i, 0)),
        ),
        compiler_params=pltpu.CompilerParams(
            dimension_semantics=("parallel",),  # row tiles shard across TCs on v7x
        ),
    )(x2, w_s, b_s)

    out_flat = out2.reshape(-1)
    if not aligned:
        out_flat = out_flat[:total]
    return out_flat.reshape(x.shape)


if __name__ == "__main__":
    key = jax.random.PRNGKey(0)
    kx1, kx2, kx3, kw, kb = jax.random.split(key, 5)

    # Same init shapes as nn.Linear(1, 1).
    weight = jax.random.uniform(kw, (1, 1), jnp.float32, minval=-1.0, maxval=1.0)
    bias = jax.random.uniform(kb, (1,), jnp.float32, minval=-1.0, maxval=1.0)

    def ref_fn(x):
        return jax.nn.sigmoid(x @ weight.T + bias)

    # 1) Tiny batch (like the module's typical use): plain-JAX fallback path.
    x_small = jax.random.normal(kx1, (8, 1), jnp.float32)
    out_small = jax.block_until_ready(
        logistic_regression_forward(x_small, weight, bias))
    assert out_small.shape == x_small.shape
    assert jnp.allclose(out_small, ref_fn(x_small), atol=2e-6)

    # 2) Lane-aligned batch (N % 128 == 0): zero-copy Pallas fast path.
    x_aligned = jax.random.normal(kx2, (16384, 1), jnp.float32)
    out_aligned = jax.block_until_ready(
        logistic_regression_forward(x_aligned, weight, bias))
    assert out_aligned.shape == x_aligned.shape
    assert jnp.allclose(out_aligned, ref_fn(x_aligned), atol=2e-6)

    # 3) Ragged batch: Pallas kernel with masked tail handling.
    x_ragged = jax.random.normal(kx3, (10000, 1), jnp.float32)
    out_ragged = jax.block_until_ready(
        logistic_regression_forward(x_ragged, weight, bias))
    assert out_ragged.shape == x_ragged.shape
    assert jnp.allclose(out_ragged, ref_fn(x_ragged), atol=2e-6)

    print("KERNEL_OK")
</pallas_src>

<mosaic_0001>
module attributes {stable_mosaic.version = 11 : i64} {
  func.func @_logistic_kernel(%arg0: i32, %arg1: memref<128x128xf32, #tpu.memory_space<vmem>>, %arg2: memref<1xf32, #tpu.memory_space<smem>>, %arg3: memref<1xf32, #tpu.memory_space<smem>>, %arg4: memref<128x128xf32, #tpu.memory_space<vmem>>) attributes {dimension_semantics = [#tpu.dimension_semantics<parallel>], iteration_bounds = array<i64: 1>, scalar_prefetch = 0 : i64, scratch_operands = 0 : i64, tpu.core_type = #tpu.core_type<tc>, window_params = [{transform_indices = @transform_0, window_bounds = array<i64: 128, 128>}, {transform_indices = @transform_1, window_bounds = array<i64: 1>}, {transform_indices = @transform_2, window_bounds = array<i64: 1>}, {transform_indices = @transform_3, window_bounds = array<i64: 128, 128>}]} {
    %c0 = arith.constant 0 : index
    %0 = memref.load %arg2[%c0] : memref<1xf32, #tpu.memory_space<smem>>
    %c0_0 = arith.constant 0 : index
    %1 = memref.load %arg3[%c0_0] : memref<1xf32, #tpu.memory_space<smem>>
    %c0_1 = arith.constant 0 : index
    %c0_2 = arith.constant 0 : index
    %2 = vector.load %arg1[%c0_1, %c0_2] : memref<128x128xf32, #tpu.memory_space<vmem>>, vector<128x128xf32>
    %3 = vector.broadcast %0 : f32 to vector<128x128xf32>
    %4 = arith.mulf %2, %3 : vector<128x128xf32>
    %5 = vector.broadcast %1 : f32 to vector<128x128xf32>
    %6 = arith.addf %4, %5 : vector<128x128xf32>
    %cst = arith.constant 5.000000e-01 : f32
    %7 = vector.broadcast %cst : f32 to vector<128x128xf32>
    %8 = arith.mulf %7, %6 : vector<128x128xf32>
    %9 = math.tanh %8 : vector<128x128xf32>
    %cst_3 = arith.constant 1.000000e+00 : f32
    %10 = vector.broadcast %cst_3 : f32 to vector<128x128xf32>
    %11 = arith.addf %9, %10 : vector<128x128xf32>
    %cst_4 = arith.constant 5.000000e-01 : f32
    %12 = vector.broadcast %cst_4 : f32 to vector<128x128xf32>
    %13 = arith.mulf %12, %11 : vector<128x128xf32>
    %c0_5 = arith.constant 0 : index
    %c0_6 = arith.constant 0 : index
    %14 = vector.load %arg4[%c0_5, %c0_6] : memref<128x128xf32, #tpu.memory_space<vmem>>, vector<128x128xf32>
    tpu.vector_store %arg4[%c0_5, %c0_6], %13 {strides = array<i32>} : memref<128x128xf32, #tpu.memory_space<vmem>>, vector<128x128xf32>,
    return
  }
  func.func @transform_0(%arg0: i32) -> (i32, i32) {
    %c0_i32 = arith.constant 0 : i32
    %c0_i32_0 = arith.constant 0 : i32
    return %arg0, %c0_i32 : i32, i32
  }
  func.func @transform_1(%arg0: i32) -> i32 {
    %c0_i32 = arith.constant 0 : i32
    %c0_i32_0 = arith.constant 0 : i32
    return %c0_i32 : i32
  }
  func.func @transform_2(%arg0: i32) -> i32 {
    %c0_i32 = arith.constant 0 : i32
    %c0_i32_0 = arith.constant 0 : i32
    return %c0_i32 : i32
  }
  func.func @transform_3(%arg0: i32) -> (i32, i32) {
    %c0_i32 = arith.constant 0 : i32
    %c0_i32_0 = arith.constant 0 : i32
    return %arg0, %c0_i32 : i32, i32
  }
}

</mosaic_0001>

<llo_original>
// kernel: tpu_custom_call.1
$region0: #{tpu_custom_call.1}
  #allocation0 [shape = 'u32[]', space=smem, size = 0x4, offset = 0x4, fixed_abs, tag = 'smem constant byte address 0x4 - core index']
  #allocation1 [shape = 'u32[144,128]{1,0:T(1,128)}', space=vmem, size = 0x12000, scoped, tag = 'internal scratch']
  #allocation2 [shape = 'f32[1]{0:T(128)S(6)}', space=smem, size = 0x200, scoped, tag = 'scoped memory for tpu_custom_call.1']
  #allocation3 [shape = 'f32[1]{0:T(128)S(6)}', space=smem, size = 0x200, scoped, tag = 'scoped memory for tpu_custom_call.1']
  %s0 = inlined_call_operand.hbm [shape: f32[128,128], index: 0, kind: input, shape index: {}]
  %s1 = inlined_call_operand.<no memory space> [shape: f32[1], index: 1, kind: input, shape index: {}]
  %s2 = inlined_call_operand.<no memory space> [shape: f32[1], index: 2, kind: input, shape index: {}]
  %s3 = inlined_call_operand.hbm [shape: f32[128,128], index: 3, kind: output, shape index: {}]
  %s4 = sld [smem:[#allocation0]]
  $region26: #{tpu_custom_call.1} parent=0
    _
  %s6 = ssub.s32 1, %s4
  %s7 = scalar_select 0, %s6, %s4
  %8 = sst [smem:[#allocation2]] %s1
  %9 = sst [smem:[#allocation3]] %s2
  $region1: #{tpu_custom_call.1} parent=0
    #allocation4 [shape = 'u8[65536]{0}', space=vmem, size = 0x10000, scoped, tag = 'input window, operand 0, single buffered']
    #allocation5 [shape = 's32[1]{0}', space=sflag, size = 0x4, scoped, tag = 'scoped memory for tpu_custom_call.1']
    #allocation6 [shape = 's32[1]{0}', space=sflag, size = 0x4, scoped, tag = 'scoped memory for tpu_custom_call.1']
    #allocation7 [shape = 'u8[65536]{0}', space=vmem, size = 0x10000, scoped, tag = 'output window, operand 0, single buffered']
    %10 = vsyncpa [#allocation5], 0
    %11 = vsyncpa [#allocation6], 0
    // Predicated region
    $region2: #{tpu_custom_call.1} parent=1 // pred_check
      _
    $region3: #{tpu_custom_call.1} parent=1 // pred_check_branch
      %13 = sbr.rel (0) target = $region5
    $region4: #{tpu_custom_call.1} parent=1 // pred_region
      %s15 = ssub.s32 2048, 2048
      %16 = vsyncadd [#allocation5], %s15
      %s17 = sshll.u32 [#allocation4], 4
      %s18 = int_to_ptr.vmem [resolvable:$true] %s17
      %23 = dma.hbm_to_vmem [thread:$0]  %s0, 2048, %s18, [#allocation5], 128, 128, 8
    $region5: #{tpu_custom_call.1} parent=1 // pred_fallthru
      _
    // Predicated region
    $region6: #{tpu_custom_call.1} parent=1 // pred_check
      _
    $region7: #{tpu_custom_call.1} parent=1 // pred_check_branch
      %25 = sbr.rel (0) target = $region9
    $region8: #{tpu_custom_call.1} parent=1 // pred_region
      _
    $region9: #{tpu_custom_call.1} parent=1 // pred_fallthru
      _
    // Predicated region
    $region10: #{tpu_custom_call.1} parent=1 // pred_check
      _
    $region11: #{tpu_custom_call.1} parent=1 // pred_check_branch
      %27 = sbr.rel (0) target = $region13
    $region12: #{tpu_custom_call.1} parent=1 // pred_region
      _
    $region13: #{tpu_custom_call.1} parent=1 // pred_fallthru
      _
    // Predicated region
    $region14: #{tpu_custom_call.1} parent=1 // pred_check
      _
    $region15: #{tpu_custom_call.1} parent=1 // pred_check_branch
      %29 = sbr.rel (0) target = $region17
    $region16: #{tpu_custom_call.1} parent=1 // pred_region
      %30 = dma.done [#allocation5], 2048
    $region17: #{tpu_custom_call.1} parent=1 // pred_fallthru
      _
    %s31 = sld [smem:[#allocation2]]
    %s32 = sld [smem:[#allocation3]]
    %v33 = vld [vmem:[#allocation4] sm:$0xff]
    %v34 = vld [vmem:[#allocation4 + $0x8] sm:$0xff]
    %v35 = vld [vmem:[#allocation4 + $0x10] sm:$0xff]
    %v36 = vld [vmem:[#allocation4 + $0x18] sm:$0xff]
    %v37 = vld [vmem:[#allocation4 + $0x20] sm:$0xff]
    %v38 = vld [vmem:[#allocation4 + $0x28] sm:$0xff]
    %v39 = vld [vmem:[#allocation4 + $0x30] sm:$0xff]
    %v40 = vld [vmem:[#allocation4 + $0x38] sm:$0xff]
    %v41 = vld [vmem:[#allocation4 + $0x40] sm:$0xff]
    %v42 = vld [vmem:[#allocation4 + $0x48] sm:$0xff]
    %v43 = vld [vmem:[#allocation4 + $0x50] sm:$0xff]
    %v44 = vld [vmem:[#allocation4 + $0x58] sm:$0xff]
    %v45 = vld [vmem:[#allocation4 + $0x60] sm:$0xff]
    %v46 = vld [vmem:[#allocation4 + $0x68] sm:$0xff]
    %v47 = vld [vmem:[#allocation4 + $0x70] sm:$0xff]
    %v48 = vld [vmem:[#allocation4 + $0x78] sm:$0xff]
    %v49 = vstv %s31
    %v50 = vmul.f32 %v33, %v49
    %v51 = vmul.f32 %v34, %v49
    %v52 = vmul.f32 %v35, %v49
    %v53 = vmul.f32 %v36, %v49
    %v54 = vmul.f32 %v37, %v49
    %v55 = vmul.f32 %v38, %v49
    %v56 = vmul.f32 %v39, %v49
    %v57 = vmul.f32 %v40, %v49
    %v58 = vmul.f32 %v41, %v49
    %v59 = vmul.f32 %v42, %v49
    %v60 = vmul.f32 %v43, %v49
    %v61 = vmul.f32 %v44, %v49
    %v62 = vmul.f32 %v45, %v49
    %v63 = vmul.f32 %v46, %v49
    %v64 = vmul.f32 %v47, %v49
    %v65 = vmul.f32 %v48, %v49
    %v66 = vstv %s32
    %v67 = vadd.f32 %v50, %v66
    %v68 = vadd.f32 %v51, %v66
    %v69 = vadd.f32 %v52, %v66
    %v70 = vadd.f32 %v53, %v66
    %v71 = vadd.f32 %v54, %v66
    %v72 = vadd.f32 %v55, %v66
    %v73 = vadd.f32 %v56, %v66
    %v74 = vadd.f32 %v57, %v66
    %v75 = vadd.f32 %v58, %v66
    %v76 = vadd.f32 %v59, %v66
    %v77 = vadd.f32 %v60, %v66
    %v78 = vadd.f32 %v61, %v66
    %v79 = vadd.f32 %v62, %v66
    %v80 = vadd.f32 %v63, %v66
    %v81 = vadd.f32 %v64, %v66
    %v82 = vadd.f32 %v65, %v66
    %v83 = vmul.f32 %v67, 0.5
    %v84 = vmul.f32 %v68, 0.5
    %v85 = vmul.f32 %v69, 0.5
    %v86 = vmul.f32 %v70, 0.5
    %v87 = vmul.f32 %v71, 0.5
    %v88 = vmul.f32 %v72, 0.5
    %v89 = vmul.f32 %v73, 0.5
    %v90 = vmul.f32 %v74, 0.5
    %v91 = vmul.f32 %v75, 0.5
    %v92 = vmul.f32 %v76, 0.5
    %v93 = vmul.f32 %v77, 0.5
    %v94 = vmul.f32 %v78, 0.5
    %v95 = vmul.f32 %v79, 0.5
    %v96 = vmul.f32 %v80, 0.5
    %v97 = vmul.f32 %v81, 0.5
    %v98 = vmul.f32 %v82, 0.5
    %v99 = vtanh.pop %v83
    %v100 = vtanh.pop %v84
    %v101 = vtanh.pop %v85
    %v102 = vtanh.pop %v86
    %v103 = vtanh.pop %v87
    %v104 = vtanh.pop %v88
    %v105 = vtanh.pop %v89
    %v106 = vtanh.pop %v90
    %v107 = vtanh.pop %v91
    %v108 = vtanh.pop %v92
    %v109 = vtanh.pop %v93
    %v110 = vtanh.pop %v94
    %v111 = vtanh.pop %v95
    %v112 = vtanh.pop %v96
    %v113 = vtanh.pop %v97
    %v114 = vtanh.pop %v98
    %v115 = vadd.f32 %v99, 1.0
    %v116 = vadd.f32 %v100, 1.0
    %v117 = vadd.f32 %v101, 1.0
    %v118 = vadd.f32 %v102, 1.0
    %v119 = vadd.f32 %v103, 1.0
    %v120 = vadd.f32 %v104, 1.0
    %v121 = vadd.f32 %v105, 1.0
    %v122 = vadd.f32 %v106, 1.0
    %v123 = vadd.f32 %v107, 1.0
    %v124 = vadd.f32 %v108, 1.0
    %v125 = vadd.f32 %v109, 1.0
    %v126 = vadd.f32 %v110, 1.0
    %v127 = vadd.f32 %v111, 1.0
    %v128 = vadd.f32 %v112, 1.0
    %v129 = vadd.f32 %v113, 1.0
    %v130 = vadd.f32 %v114, 1.0
    %v131 = vmul.f32 %v115, 0.5
    %v132 = vmul.f32 %v116, 0.5
    %v133 = vmul.f32 %v117, 0.5
    %v134 = vmul.f32 %v118, 0.5
    %v135 = vmul.f32 %v119, 0.5
    %v136 = vmul.f32 %v120, 0.5
    %v137 = vmul.f32 %v121, 0.5
    %v138 = vmul.f32 %v122, 0.5
    %v139 = vmul.f32 %v123, 0.5
    %v140 = vmul.f32 %v124, 0.5
    %v141 = vmul.f32 %v125, 0.5
    %v142 = vmul.f32 %v126, 0.5
    %v143 = vmul.f32 %v127, 0.5
    %v144 = vmul.f32 %v128, 0.5
    %v145 = vmul.f32 %v129, 0.5
    %v146 = vmul.f32 %v130, 0.5
    %147 = vst [vmem:[#allocation7] sm:$0xff] %v131
    %148 = vst [vmem:[#allocation7 + $0x8] sm:$0xff] %v132
    %149 = vst [vmem:[#allocation7 + $0x10] sm:$0xff] %v133
    %150 = vst [vmem:[#allocation7 + $0x18] sm:$0xff] %v134
    %151 = vst [vmem:[#allocation7 + $0x20] sm:$0xff] %v135
    %152 = vst [vmem:[#allocation7 + $0x28] sm:$0xff] %v136
    %153 = vst [vmem:[#allocation7 + $0x30] sm:$0xff] %v137
    %154 = vst [vmem:[#allocation7 + $0x38] sm:$0xff] %v138
    %155 = vst [vmem:[#allocation7 + $0x40] sm:$0xff] %v139
    %156 = vst [vmem:[#allocation7 + $0x48] sm:$0xff] %v140
    %157 = vst [vmem:[#allocation7 + $0x50] sm:$0xff] %v141
    %158 = vst [vmem:[#allocation7 + $0x58] sm:$0xff] %v142
    %159 = vst [vmem:[#allocation7 + $0x60] sm:$0xff] %v143
    %160 = vst [vmem:[#allocation7 + $0x68] sm:$0xff] %v144
    %161 = vst [vmem:[#allocation7 + $0x70] sm:$0xff] %v145
    %162 = vst [vmem:[#allocation7 + $0x78] sm:$0xff] %v146
    // Predicated region
    $region18: #{tpu_custom_call.1} parent=1 // pred_check
      _
    $region19: #{tpu_custom_call.1} parent=1 // pred_check_branch
      %164 = sbr.rel (0) target = $region21
    $region20: #{tpu_custom_call.1} parent=1 // pred_region
      %s166 = ssub.s32 2048, 2048
      %167 = vsyncadd [#allocation6], %s166
      %s168 = sshll.u32 [#allocation7], 4
      %s169 = int_to_ptr.vmem [resolvable:$true] %s168
      %174 = dma.vmem_to_hbm [thread:$0]  %s169, 2048, %s3, [#allocation6], 128, 128, 8
    $region21: #{tpu_custom_call.1} parent=1 // pred_fallthru
      _
    // Predicated region
    $region22: #{tpu_custom_call.1} parent=1 // pred_check
      _
    $region23: #{tpu_custom_call.1} parent=1 // pred_check_branch
      %176 = sbr.rel (0) target = $region25
    $region24: #{tpu_custom_call.1} parent=1 // pred_region
      %177 = dma.done [#allocation6], 2048
    $region25: #{tpu_custom_call.1} parent=1 // pred_fallthru
      _
    %178 = vsyncpa [#allocation5], 1
    %179 = vsyncpa [#allocation6], 1

</llo_original>
